<compile_context>
chip_gen: v7x
topology: tpu7x:2x2x1
jax: 0.10.0
libtpu: 0.0.40
codegen_flags: <defaults>
</compile_context>

<pallas_src>
import jax
import jax.numpy as jnp
from jax import lax
from jax.experimental import pallas as pl
from jax.experimental.pallas import tpu as pltpu

KH = KW = 4
STRIDE = 2
PAD = 1
NTAPS = KH * 2           # 4 kernel rows x 2 width phases
BN_EPS = 1e-5
LEAKY_SLOPE = 0.2


def _round_up(x, m):
    return (x + m - 1) // m * m


def _cdiv(a, b):
    return -(-a // b)


def _vmem_config():
    """Returns (tile budget bytes, scoped vmem_limit_bytes) - generation aware."""
    cap = 64 * 1024 * 1024
    try:
        cap = int(getattr(pltpu.get_tpu_info(), "vmem_capacity_bytes", cap)) or cap
    except Exception:
        pass
    if cap >= 96 * 1024 * 1024:                      # v5e / v6e: 128 MiB VMEM
        return 48 * 1024 * 1024, 80 * 1024 * 1024
    return 20 * 1024 * 1024, 32 * 1024 * 1024        # v7x: 64 MiB VMEM / TensorCore


def _pick_row_tile(NOH, OW, OWp1, Cinp, Coutp, budget):
    """Rows of the flattened (N*OH) axis processed per pass-1 grid step."""
    def need(toh):
        rows = toh * OW
        x_in = 2 * toh * _round_up(OWp1, 16) * _round_up(Cinp, 128) * 2   # 2 bufs, bf16, layout pad
        w_in = 2 * 2 * _round_up(Cinp, 16) * Coutp * 2                    # 2 bufs, bf16
        acc = rows * Coutp * 4                                            # f32 scratch
        y_out = 2 * rows * Coutp * 2                                      # 2 bufs, bf16
        s_out = 2 * 8 * Coutp * 4
        return x_in + w_in + acc + y_out + s_out

    cap = max(8, _round_up(NOH, 8))
    toh = 8
    for cand in (4096, 2048, 1024, 512, 256, 128, 64, 32, 16, 8):
        if cand <= cap and need(cand) <= budget:
            toh = cand
            break
    # Keep at least two row tiles so both v7x TensorCores get work (megacore).
    if NOH > 8 and _cdiv(NOH, toh) < 2:
        toh = max(8, _round_up(_cdiv(NOH, 2), 8))
    return toh


def _pick_pass2_rows(Mp, unit, Coutp, budget):
    """Pass-2 row tile: a multiple of `unit` that divides Mp, as large as the budget allows."""
    num_units = Mp // unit
    for g in range(num_units, 0, -1):
        if num_units % g:
            continue
        if num_units >= 2 and num_units // g < 2:    # keep >= 2 grid steps (megacore)
            continue
        rows = unit * g
        if 12 * rows * Coutp + 32 * Coutp <= budget:  # bf16 in + f32 out, double buffered
            return rows
    return unit


# -------- Pass 1: per-tap conv matmul (bf16 -> f32 acc) + partial BN stats --------
def _conv_stats_kernel(x_ref, w_ref, y_ref, s_ref, acc_ref):
    t = pl.program_id(1)

    @pl.when(t == 0)
    def _():
        acc_ref[...] = jnp.zeros_like(acc_ref)

    toh, owp1, cinp = x_ref.shape
    ow = owp1 - 1
    # Two width offsets per tap: static, contiguous sublane slices (no strided loads).
    for pw in range(2):
        patch = x_ref[:, pw:pw + ow, :].reshape(toh * ow, cinp)            # (rows, Cinp) bf16
        acc_ref[...] += jnp.dot(patch, w_ref[pw],
                                preferred_element_type=jnp.float32)

    @pl.when(t == pl.num_programs(1) - 1)
    def _():
        y = acc_ref[...]
        y_ref[...] = y.astype(y_ref.dtype)                                 # bf16 intermediate
        s_ref[0:1, :] = jnp.sum(y, axis=0, keepdims=True)                  # partial sum
        s_ref[1:2, :] = jnp.sum(y * y, axis=0, keepdims=True)              # partial sum of squares


# -------- Pass 2: y * scale + shift, then LeakyReLU(0.2) --------
def _bn_lrelu_kernel(y_ref, scale_ref, shift_ref, o_ref):
    y = y_ref[...].astype(jnp.float32)
    yb = y * scale_ref[...] + shift_ref[...]
    o_ref[...] = jnp.where(yb >= 0.0, yb, LEAKY_SLOPE * yb)


def downsample_block(x_nchw, weight, gamma, beta):
    """x_nchw: (N, Cin, H, W) f32; weight: (Cout, Cin, 4, 4); gamma/beta: (Cout,). Returns NCHW f32."""
    N, Cin, H, W = x_nchw.shape
    Cout = weight.shape[0]
    OH = (H + 2 * PAD - KH) // STRIDE + 1
    OW = (W + 2 * PAD - KW) // STRIDE + 1
    OWp1 = OW + 1
    NOH = N * OH
    M = N * OH * OW

    Cinp = max(8, _round_up(Cin, 8))
    Coutp = _round_up(Cout, 128)
    budget, vmem_limit = _vmem_config()
    toh = _pick_row_tile(NOH, OW, OWp1, Cinp, Coutp, budget)
    num_i = _cdiv(NOH, toh)
    NOHp = num_i * toh
    Mp = NOHp * OW
    rows = toh * OW

    # ---- XLA glue: NHWC, reflect pad, bf16 cast, then 8 strided tap views (~1x input volume) ----
    x = jnp.transpose(x_nchw, (0, 2, 3, 1))
    xpad = jnp.pad(x, ((0, 0), (PAD, PAD), (PAD, PAD), (0, 0)), mode="reflect")
    xpad = xpad.astype(jnp.bfloat16)                                        # cast BEFORE slicing
    xpad = jnp.pad(xpad, ((0, 0), (0, 0), (0, 0), (0, Cinp - Cin)))
    taps = []
    for kh in range(KH):
        xh = xpad[:, kh:kh + STRIDE * OH:STRIDE]                            # (N, OH, W+2, Cinp)
        for dw in range(2):
            taps.append(xh[:, :, dw::2, :])                                 # (N, OH, OW+1, Cinp)
    xtaps = jnp.stack(taps, axis=0).reshape(NTAPS, NOH, OWp1, Cinp)
    xtaps = jnp.pad(xtaps, ((0, 0), (0, NOHp - NOH), (0, 0), (0, 0)))       # zero rows: stats-safe

    # Weight (Cout, Cin, kh, kw) -> per-(kh,dw) tap matrices of shape (2[pw], Cinp, Coutp).
    w = jnp.transpose(weight, (2, 3, 1, 0))                                 # (kh, kw, Cin, Cout)
    w = jnp.pad(w, ((0, 0), (0, 0), (0, Cinp - Cin), (0, Coutp - Cout)))
    w = w.reshape(KH, 2, 2, Cinp, Coutp)                                    # (kh, pw, dw, Cin, Cout)
    w_taps = jnp.transpose(w, (0, 2, 1, 3, 4)).reshape(NTAPS, 2, Cinp, Coutp).astype(jnp.bfloat16)

    cparams1 = pltpu.CompilerParams(
        dimension_semantics=("parallel", "arbitrary"),
        vmem_limit_bytes=vmem_limit,
    )

    y_conv, partial = pl.pallas_call(
        _conv_stats_kernel,
        out_shape=(
            jax.ShapeDtypeStruct((Mp, Coutp), jnp.bfloat16),                # bf16 intermediate
            jax.ShapeDtypeStruct((num_i, 2, Coutp), jnp.float32),           # per-tile (sum, sum^2)
        ),
        grid=(num_i, NTAPS),
        in_specs=[
            pl.BlockSpec((None, toh, OWp1, Cinp), lambda i, t: (t, i, 0, 0)),
            pl.BlockSpec((None, 2, Cinp, Coutp), lambda i, t: (t, 0, 0, 0)),
        ],
        out_specs=(
            pl.BlockSpec((rows, Coutp), lambda i, t: (i, 0)),
            pl.BlockSpec((None, 2, Coutp), lambda i, t: (i, 0, 0)),
        ),
        scratch_shapes=[pltpu.VMEM((rows, Coutp), jnp.float32)],
        compiler_params=cparams1,
        cost_estimate=pl.CostEstimate(
            flops=2 * Mp * KH * KW * Cinp * Coutp,
            transcendentals=0,
            bytes_accessed=(xtaps.size * 2 + num_i * w_taps.size * 2
                            + Mp * Coutp * 2 + num_i * 2 * Coutp * 4),
        ),
    )(xtaps, w_taps)

    # ---- Global BN statistics ((Cout,)-sized) + fold gamma/beta into scale/shift ----
    # TODO(synk): E[y^2]-E[y]^2 in f32 can cancel when |mean| >> std at very large M;
    # a Welford-style per-tile combine would be more robust.
    stats = jnp.sum(partial, axis=0)                                        # (2, Coutp)
    mean = stats[0] / M                                                     # real M (padded rows are 0)
    var = jnp.maximum(stats[1] / M - mean * mean, 0.0)
    inv = lax.rsqrt(var + BN_EPS)
    gamma_p = jnp.pad(gamma.astype(jnp.float32), (0, Coutp - Cout))
    beta_p = jnp.pad(beta.astype(jnp.float32), (0, Coutp - Cout))
    scale = (gamma_p * inv).reshape(1, Coutp)
    shift = (beta_p - mean * gamma_p * inv).reshape(1, Coutp)

    # ---- Pass 2: normalize + LeakyReLU, with its own (larger) row tile ----
    rows2 = _pick_pass2_rows(Mp, rows, Coutp, budget)
    num_m2 = Mp // rows2
    cparams2 = pltpu.CompilerParams(
        dimension_semantics=("parallel",),
        vmem_limit_bytes=vmem_limit,
    )
    out = pl.pallas_call(
        _bn_lrelu_kernel,
        out_shape=jax.ShapeDtypeStruct((Mp, Coutp), jnp.float32),
        grid=(num_m2,),
        in_specs=[
            pl.BlockSpec((rows2, Coutp), lambda i: (i, 0)),
            pl.BlockSpec((1, Coutp), lambda i: (0, 0)),
            pl.BlockSpec((1, Coutp), lambda i: (0, 0)),
        ],
        out_specs=pl.BlockSpec((rows2, Coutp), lambda i: (i, 0)),
        compiler_params=cparams2,
        cost_estimate=pl.CostEstimate(
            flops=4 * Mp * Coutp,
            transcendentals=0,
            bytes_accessed=Mp * Coutp * (2 + 4) + 4 * Coutp * 4,
        ),
    )(y_conv, scale, shift)

    # NOTE: the final NCHW transpose is kept only to match the PyTorch module's output layout;
    # chained pix2pix blocks could consume the NHWC / (M, Cout) form directly and skip it.
    out = out[:M, :Cout].reshape(N, OH, OW, Cout)
    return jnp.transpose(out, (0, 3, 1, 2))


def _reference(x, weight, gamma, beta):
    """Pure-JAX f32 reference matching the PyTorch module (dropout=False)."""
    xpad = jnp.pad(x, ((0, 0), (0, 0), (PAD, PAD), (PAD, PAD)), mode="reflect")
    y = lax.conv_general_dilated(
        xpad, weight, window_strides=(STRIDE, STRIDE), padding="VALID",
        dimension_numbers=("NCHW", "OIHW", "NCHW"))
    mean = jnp.mean(y, axis=(0, 2, 3), keepdims=True)
    var = jnp.mean((y - mean) ** 2, axis=(0, 2, 3), keepdims=True)
    yhat = (y - mean) * lax.rsqrt(var + BN_EPS)
    ybn = yhat * gamma.reshape(1, -1, 1, 1) + beta.reshape(1, -1, 1, 1)
    return jnp.where(ybn >= 0, ybn, LEAKY_SLOPE * ybn)


if __name__ == "__main__":
    key = jax.random.PRNGKey(0)
    k_x, k_w, k_g, k_b = jax.random.split(key, 4)

    N, Cin, Cout, H, W = 2, 4, 8, 16, 16
    x = jax.random.normal(k_x, (N, Cin, H, W), dtype=jnp.float32)
    # Conv2d has bias=False; BN affine parameters made non-trivial for a stronger check.
    weight = 0.05 * jax.random.normal(k_w, (Cout, Cin, KH, KW), dtype=jnp.float32)
    gamma = 1.0 + 0.1 * jax.random.normal(k_g, (Cout,), dtype=jnp.float32)
    beta = 0.1 * jax.random.normal(k_b, (Cout,), dtype=jnp.float32)

    y = jax.jit(downsample_block)(x, weight, gamma, beta)
    jax.block_until_ready(y)
    assert y.shape == (N, Cout, H // 2, W // 2)
    assert y.dtype == jnp.float32

    y_ref = _reference(x, weight, gamma, beta)
    err = float(jnp.max(jnp.abs(y - y_ref)))
    assert err < 1e-1, f"max abs err vs reference: {err}"
    print("KERNEL_OK")
</pallas_src>

<mosaic_0001>
module attributes {stable_mosaic.version = 11 : i64} {
  func.func @_conv_stats_kernel(%arg0: i32, %arg1: i32, %arg2: memref<1x8x9x8xbf16, #tpu.memory_space<vmem>>, %arg3: memref<1x2x8x128xbf16, #tpu.memory_space<vmem>>, %arg4: memref<64x128xbf16, #tpu.memory_space<vmem>>, %arg5: memref<1x2x128xf32, #tpu.memory_space<vmem>>, %arg6: memref<64x128xf32, #tpu.memory_space<vmem>>) attributes {dimension_semantics = [#tpu.dimension_semantics<parallel>, #tpu.dimension_semantics<arbitrary>], iteration_bounds = array<i64: 2, 8>, scalar_prefetch = 0 : i64, scratch_operands = 1 : i64, tpu.core_type = #tpu.core_type<tc>, window_params = [{transform_indices = @transform_0, window_bounds = array<i64: 1, 8, 9, 8>}, {transform_indices = @transform_1, window_bounds = array<i64: 1, 2, 8, 128>}, {transform_indices = @transform_2, window_bounds = array<i64: 64, 128>}, {transform_indices = @transform_3, window_bounds = array<i64: 1, 2, 128>}]} {
    %c0_i32 = arith.constant 0 : i32
    %0 = arith.cmpi eq, %arg1, %c0_i32 : i32
    %1 = arith.extui %0 : i1 to i32
    %c0_i32_0 = arith.constant 0 : i32
    %2 = arith.cmpi ne, %1, %c0_i32_0 : i32
    scf.if %2 {
      %cst_25 = arith.constant 0.000000e+00 : f32
      %24 = vector.broadcast %cst_25 : f32 to vector<64x128xf32>
      %c0_26 = arith.constant 0 : index
      %c0_27 = arith.constant 0 : index
      %25 = vector.load %arg6[%c0_26, %c0_27] : memref<64x128xf32, #tpu.memory_space<vmem>>, vector<64x128xf32>
      tpu.vector_store %arg6[%c0_26, %c0_27], %24 {strides = array<i32>} : memref<64x128xf32, #tpu.memory_space<vmem>>, vector<64x128xf32>,
    } else {
    }
    %c0 = arith.constant 0 : index
    %c0_1 = arith.constant 0 : index
    %c0_2 = arith.constant 0 : index
    %c0_3 = arith.constant 0 : index
    %3 = vector.load %arg2[%c0, %c0_1, %c0_2, %c0_3] : memref<1x8x9x8xbf16, #tpu.memory_space<vmem>>, vector<1x8x8x8xbf16>
    %4 = vector.shape_cast %3 : vector<1x8x8x8xbf16> to vector<8x8x8xbf16>
    %5 = vector.shape_cast %4 : vector<8x8x8xbf16> to vector<64x8xbf16>
    %c0_4 = arith.constant 0 : index
    %c0_5 = arith.constant 0 : index
    %6 = vector.load %arg6[%c0_4, %c0_5] : memref<64x128xf32, #tpu.memory_space<vmem>>, vector<64x128xf32>
    %c0_6 = arith.constant 0 : index
    %c0_7 = arith.constant 0 : index
    %c0_8 = arith.constant 0 : index
    %c0_9 = arith.constant 0 : index
    %7 = vector.load %arg3[%c0_6, %c0_7, %c0_8, %c0_9] : memref<1x2x8x128xbf16, #tpu.memory_space<vmem>>, vector<1x1x8x128xbf16>
    %8 = vector.shape_cast %7 : vector<1x1x8x128xbf16> to vector<8x128xbf16>
    %cst = arith.constant dense<0.000000e+00> : vector<64x128xf32>
    %9 = tpu.matmul %5, %8, %cst {dimension_numbers = #tpu.dot_dimension_numbers<[1], [0], [0], [1], [0, 0, 1, 1], [], []>} : vector<64x8xbf16>, vector<8x128xbf16>, vector<64x128xf32> -> vector<64x128xf32>
    %10 = arith.addf %6, %9 : vector<64x128xf32>
    %c0_10 = arith.constant 0 : index
    %c0_11 = arith.constant 0 : index
    %11 = vector.load %arg6[%c0_10, %c0_11] : memref<64x128xf32, #tpu.memory_space<vmem>>, vector<64x128xf32>
    tpu.vector_store %arg6[%c0_10, %c0_11], %10 {strides = array<i32>} : memref<64x128xf32, #tpu.memory_space<vmem>>, vector<64x128xf32>,
    %c0_12 = arith.constant 0 : index
    %c0_13 = arith.constant 0 : index
    %c1 = arith.constant 1 : index
    %c0_14 = arith.constant 0 : index
    %12 = vector.load %arg2[%c0_12, %c0_13, %c1, %c0_14] : memref<1x8x9x8xbf16, #tpu.memory_space<vmem>>, vector<1x8x8x8xbf16>
    %13 = vector.shape_cast %12 : vector<1x8x8x8xbf16> to vector<8x8x8xbf16>
    %14 = vector.shape_cast %13 : vector<8x8x8xbf16> to vector<64x8xbf16>
    %c0_15 = arith.constant 0 : index
    %c0_16 = arith.constant 0 : index
    %15 = vector.load %arg6[%c0_15, %c0_16] : memref<64x128xf32, #tpu.memory_space<vmem>>, vector<64x128xf32>
    %c0_17 = arith.constant 0 : index
    %c1_18 = arith.constant 1 : index
    %c0_19 = arith.constant 0 : index
    %c0_20 = arith.constant 0 : index
    %16 = vector.load %arg3[%c0_17, %c1_18, %c0_19, %c0_20] : memref<1x2x8x128xbf16, #tpu.memory_space<vmem>>, vector<1x1x8x128xbf16>
    %17 = vector.shape_cast %16 : vector<1x1x8x128xbf16> to vector<8x128xbf16>
    %cst_21 = arith.constant dense<0.000000e+00> : vector<64x128xf32>
    %18 = tpu.matmul %14, %17, %cst_21 {dimension_numbers = #tpu.dot_dimension_numbers<[1], [0], [0], [1], [0, 0, 1, 1], [], []>} : vector<64x8xbf16>, vector<8x128xbf16>, vector<64x128xf32> -> vector<64x128xf32>
    %19 = arith.addf %15, %18 : vector<64x128xf32>
    %c0_22 = arith.constant 0 : index
    %c0_23 = arith.constant 0 : index
    %20 = vector.load %arg6[%c0_22, %c0_23] : memref<64x128xf32, #tpu.memory_space<vmem>>, vector<64x128xf32>
    tpu.vector_store %arg6[%c0_22, %c0_23], %19 {strides = array<i32>} : memref<64x128xf32, #tpu.memory_space<vmem>>, vector<64x128xf32>,
    %c7_i32 = arith.constant 7 : i32
    %21 = arith.cmpi eq, %arg1, %c7_i32 : i32
    %22 = arith.extui %21 : i1 to i32
    %c0_i32_24 = arith.constant 0 : i32
    %23 = arith.cmpi ne, %22, %c0_i32_24 : i32
    scf.if %23 {
      %c0_25 = arith.constant 0 : index
      %c0_26 = arith.constant 0 : index
      %24 = vector.load %arg6[%c0_25, %c0_26] : memref<64x128xf32, #tpu.memory_space<vmem>>, vector<64x128xf32>
      %25 = arith.truncf %24 : vector<64x128xf32> to vector<64x128xbf16>
      %c0_27 = arith.constant 0 : index
      %c0_28 = arith.constant 0 : index
      %26 = vector.load %arg4[%c0_27, %c0_28] : memref<64x128xbf16, #tpu.memory_space<vmem>>, vector<64x128xbf16>
      tpu.vector_store %arg4[%c0_27, %c0_28], %25 {strides = array<i32>} : memref<64x128xbf16, #tpu.memory_space<vmem>>, vector<64x128xbf16>,
      %cst_29 = arith.constant dense<0.000000e+00> : vector<128xf32>
      %27 = vector.multi_reduction <add>, %24, %cst_29 [0] : vector<64x128xf32> to vector<128xf32>
      %28 = vector.shape_cast %27 : vector<128xf32> to vector<1x128xf32>
      %c0_30 = arith.constant 0 : index
      %c0_31 = arith.constant 0 : index
      %c0_32 = arith.constant 0 : index
      %29 = vector.load %arg5[%c0_30, %c0_31, %c0_32] : memref<1x2x128xf32, #tpu.memory_space<vmem>>, vector<1x1x128xf32>
      %30 = vector.shape_cast %29 : vector<1x1x128xf32> to vector<1x128xf32>
      %31 = vector.shape_cast %28 : vector<1x128xf32> to vector<1x1x128xf32>
      tpu.vector_store %arg5[%c0_30, %c0_31, %c0_32], %31 {strides = array<i32>} : memref<1x2x128xf32, #tpu.memory_space<vmem>>, vector<1x1x128xf32>,
      %32 = arith.mulf %24, %24 : vector<64x128xf32>
      %cst_33 = arith.constant dense<0.000000e+00> : vector<128xf32>
      %33 = vector.multi_reduction <add>, %32, %cst_33 [0] : vector<64x128xf32> to vector<128xf32>
      %34 = vector.shape_cast %33 : vector<128xf32> to vector<1x128xf32>
      %c0_34 = arith.constant 0 : index
      %c1_35 = arith.constant 1 : index
      %c0_36 = arith.constant 0 : index
      %35 = vector.load %arg5[%c0_34, %c1_35, %c0_36] : memref<1x2x128xf32, #tpu.memory_space<vmem>>, vector<1x1x128xf32>
      %36 = vector.shape_cast %35 : vector<1x1x128xf32> to vector<1x128xf32>
      %37 = vector.shape_cast %34 : vector<1x128xf32> to vector<1x1x128xf32>
      tpu.vector_store %arg5[%c0_34, %c1_35, %c0_36], %37 {strides = array<i32>} : memref<1x2x128xf32, #tpu.memory_space<vmem>>, vector<1x1x128xf32>,
    } else {
    }
    return
  }
  func.func @transform_0(%arg0: i32, %arg1: i32) -> (i32, i32, i32, i32) {
    %c0_i32 = arith.constant 0 : i32
    %c0_i32_0 = arith.constant 0 : i32
    %c0_i32_1 = arith.constant 0 : i32
    return %arg1, %arg0, %c0_i32, %c0_i32_0 : i32, i32, i32, i32
  }
  func.func @transform_1(%arg0: i32, %arg1: i32) -> (i32, i32, i32, i32) {
    %c0_i32 = arith.constant 0 : i32
    %c0_i32_0 = arith.constant 0 : i32
    %c0_i32_1 = arith.constant 0 : i32
    %c0_i32_2 = arith.constant 0 : i32
    return %arg1, %c0_i32, %c0_i32_0, %c0_i32_1 : i32, i32, i32, i32
  }
  func.func @transform_2(%arg0: i32, %arg1: i32) -> (i32, i32) {
    %c0_i32 = arith.constant 0 : i32
    %c0_i32_0 = arith.constant 0 : i32
    return %arg0, %c0_i32 : i32, i32
  }
  func.func @transform_3(%arg0: i32, %arg1: i32) -> (i32, i32, i32) {
    %c0_i32 = arith.constant 0 : i32
    %c0_i32_0 = arith.constant 0 : i32
    %c0_i32_1 = arith.constant 0 : i32
    return %arg0, %c0_i32, %c0_i32_0 : i32, i32, i32
  }
}

module attributes {stable_mosaic.version = 11 : i64} {
  func.func @_bn_lrelu_kernel(%arg0: i32, %arg1: memref<64x128xbf16, #tpu.memory_space<vmem>>, %arg2: memref<1x128xf32, #tpu.memory_space<vmem>>, %arg3: memref<1x128xf32, #tpu.memory_space<vmem>>, %arg4: memref<64x128xf32, #tpu.memory_space<vmem>>) attributes {dimension_semantics = [#tpu.dimension_semantics<parallel>], iteration_bounds = array<i64: 2>, scalar_prefetch = 0 : i64, scratch_operands = 0 : i64, tpu.core_type = #tpu.core_type<tc>, window_params = [{transform_indices = @transform_0, window_bounds = array<i64: 64, 128>}, {pipeline_mode = #tpu.pipeline_mode<synchronous>, transform_indices = @transform_1, window_bounds = array<i64: 1, 128>}, {pipeline_mode = #tpu.pipeline_mode<synchronous>, transform_indices = @transform_2, window_bounds = array<i64: 1, 128>}, {transform_indices = @transform_3, window_bounds = array<i64: 64, 128>}]} {
    %c0 = arith.constant 0 : index
    %c0_0 = arith.constant 0 : index
    %0 = vector.load %arg1[%c0, %c0_0] : memref<64x128xbf16, #tpu.memory_space<vmem>>, vector<64x128xbf16>
    %1 = arith.extf %0 : vector<64x128xbf16> to vector<64x128xf32>
    %c0_1 = arith.constant 0 : index
    %c0_2 = arith.constant 0 : index
    %2 = vector.load %arg2[%c0_1, %c0_2] : memref<1x128xf32, #tpu.memory_space<vmem>>, vector<1x128xf32>
    %3 = vector.broadcast %2 : vector<1x128xf32> to vector<64x128xf32>
    %4 = arith.mulf %1, %3 : vector<64x128xf32>
    %c0_3 = arith.constant 0 : index
    %c0_4 = arith.constant 0 : index
    %5 = vector.load %arg3[%c0_3, %c0_4] : memref<1x128xf32, #tpu.memory_space<vmem>>, vector<1x128xf32>
    %6 = vector.broadcast %5 : vector<1x128xf32> to vector<64x128xf32>
    %7 = arith.addf %4, %6 : vector<64x128xf32>
    %cst = arith.constant 0.000000e+00 : f32
    %8 = vector.broadcast %cst : f32 to vector<64x128xf32>
    %9 = arith.cmpf oge, %7, %8 : vector<64x128xf32>
    %cst_5 = arith.constant 2.000000e-01 : f32
    %10 = vector.broadcast %cst_5 : f32 to vector<64x128xf32>
    %11 = arith.mulf %10, %7 : vector<64x128xf32>
    %12 = arith.select %9, %7, %11 : vector<64x128xi1>, vector<64x128xf32>
    %c0_6 = arith.constant 0 : index
    %c0_7 = arith.constant 0 : index
    %13 = vector.load %arg4[%c0_6, %c0_7] : memref<64x128xf32, #tpu.memory_space<vmem>>, vector<64x128xf32>
    tpu.vector_store %arg4[%c0_6, %c0_7], %12 {strides = array<i32>} : memref<64x128xf32, #tpu.memory_space<vmem>>, vector<64x128xf32>,
    return
  }
  func.func @transform_0(%arg0: i32) -> (i32, i32) {
    %c0_i32 = arith.constant 0 : i32
    %c0_i32_0 = arith.constant 0 : i32
    return %arg0, %c0_i32 : i32, i32
  }
  func.func @transform_1(%arg0: i32) -> (i32, i32) {
    %c0_i32 = arith.constant 0 : i32
    %c0_i32_0 = arith.constant 0 : i32
    %c0_i32_1 = arith.constant 0 : i32
    return %c0_i32, %c0_i32_0 : i32, i32
  }
  func.func @transform_2(%arg0: i32) -> (i32, i32) {
    %c0_i32 = arith.constant 0 : i32
    %c0_i32_0 = arith.constant 0 : i32
    %c0_i32_1 = arith.constant 0 : i32
    return %c0_i32, %c0_i32_0 : i32, i32
  }
  func.func @transform_3(%arg0: i32) -> (i32, i32) {
    %c0_i32 = arith.constant 0 : i32
    %c0_i32_0 = arith.constant 0 : i32
    return %arg0, %c0_i32 : i32, i32
  }
}

</mosaic_0001>

<llo_original>
// kernel: downsample_block.3
$region0: #{downsample_block.3}
  #allocation0 [shape = 'u32[]', space=smem, size = 0x4, offset = 0x4, fixed_abs, tag = 'smem constant byte address 0x4 - core index']
  #allocation1 [shape = 'u32[144,128]{1,0:T(1,128)}', space=vmem, size = 0x12000, scoped, tag = 'internal scratch']
  %s0 = inlined_call_operand.vmem [shape: bf16[128,128], index: 0, kind: input, shape index: {}]
  %s1 = inlined_call_operand.vmem [shape: f32[1,128], index: 1, kind: input, shape index: {}]
  %s2 = inlined_call_operand.vmem [shape: f32[1,128], index: 2, kind: input, shape index: {}]
  %s3 = inlined_call_operand.vmem [shape: f32[128,128], index: 3, kind: output, shape index: {}]
  %s4 = sld [smem:[#allocation0]]
  $region45: #{downsample_block.3} parent=0
    _
  %s6 = ssub.s32 1, %s4
  %s7 = scalar_select 0, %s6, %s4
  loop: start=0, step=1, limit=4
  $region2: #{downsample_block.3} parent=0 // loop_pre_header
    _
  $region3: #{downsample_block.3} parent=0 // loop_header
    %s9 = sphi 0, %s13
    %p10 = scmp.ge.s32.totalorder %s9, 4
    %s19 = sphi 0, %s21
    %s22 = sphi 0, %s19
    %s23 = sphi 0, %s22
    %s39 = sphi 0, %s23
    %s43 = sphi 0, %s43
    %s45 = sphi 0, %s43
    %s46 = sphi 0, %s45
    %s60 = sphi 0, %s46
    %s64 = sphi 0, %s64
    %s66 = sphi 0, %s64
    %s67 = sphi 0, %s66
    %s81 = sphi 0, %s67
    %s87 = sphi 0, %s89
    %s90 = sphi 0, %s87
    %s91 = sphi 0, %s90
    %s107 = sphi 0, %s91
  $region4: #{downsample_block.3} parent=0 // loop_header_branch
    %12 = sbr.rel (%p10) target = $region8
  $region5: #{downsample_block.3} parent=0 // loop_body
    %s14 = ssub.s32 %s9, 1
    %s15 = ssub.s32 %s9, 2
    %s16 = sadd.s32 %s9, 1
    %s17 = ssub.s32 %s9, %s16
    %p18 = scmp.eq.s32.totalorder %s17, 0
    %s20 = sadd.s32 %s19, 1
    %s21 = scalar_select %p18, %s19, %s20
    %p24 = pneg %p18
    %p25 = scmp.eq.s32.totalorder %s9, 1
    %p26 = por %p24, %p25
    %p27 = scmp.ne.s32.totalorder %s19, %s22
    %p28 = scmp.eq.s32.totalorder %s9, 0
    %p29 = por %p27, %p28
    %p30 = scmp.ne.s32.totalorder %s19, %s22
    %p31 = scmp.eq.s32.totalorder %s14, 1
    %p32 = por %p30, %p31
    %p33 = scmp.ne.s32.totalorder %s22, %s23
    %p34 = scmp.eq.s32.totalorder %s14, 0
    %p35 = por %p33, %p34
    %p36 = scmp.ne.s32.totalorder %s22, %s23
    %p37 = scmp.eq.s32.totalorder %s15, 1
    %p38 = por %p36, %p37
    %p40 = scmp.ne.s32.totalorder %s23, %s39
    %p41 = scmp.eq.s32.totalorder %s15, 0
    %p42 = por %p40, %p41
    %s44 = sadd.s32 %s43, 1
    %p47 = scmp.eq.s32.totalorder %s9, 1
    %p48 = scmp.ne.s32.totalorder %s43, %s45
    %p49 = scmp.eq.s32.totalorder %s9, 0
    %p50 = por %p48, %p49
    %p51 = scmp.ne.s32.totalorder %s43, %s45
    %p52 = scmp.eq.s32.totalorder %s14, 1
    %p53 = por %p51, %p52
    %p54 = scmp.ne.s32.totalorder %s45, %s46
    %p55 = scmp.eq.s32.totalorder %s14, 0
    %p56 = por %p54, %p55
    %p57 = scmp.ne.s32.totalorder %s45, %s46
    %p58 = scmp.eq.s32.totalorder %s15, 1
    %p59 = por %p57, %p58
    %p61 = scmp.ne.s32.totalorder %s46, %s60
    %p62 = scmp.eq.s32.totalorder %s15, 0
    %p63 = por %p61, %p62
    %s65 = sadd.s32 %s64, 1
    %p68 = scmp.eq.s32.totalorder %s9, 1
    %p69 = scmp.ne.s32.totalorder %s64, %s66
    %p70 = scmp.eq.s32.totalorder %s9, 0
    %p71 = por %p69, %p70
    %p72 = scmp.ne.s32.totalorder %s64, %s66
    %p73 = scmp.eq.s32.totalorder %s14, 1
    %p74 = por %p72, %p73
    %p75 = scmp.ne.s32.totalorder %s66, %s67
    %p76 = scmp.eq.s32.totalorder %s14, 0
    %p77 = por %p75, %p76
    %p78 = scmp.ne.s32.totalorder %s66, %s67
    %p79 = scmp.eq.s32.totalorder %s15, 1
    %p80 = por %p78, %p79
    %p82 = scmp.ne.s32.totalorder %s67, %s81
    %p83 = scmp.eq.s32.totalorder %s15, 0
    %p84 = por %p82, %p83
    %s85 = ssub.s32 %s9, %s16
    %p86 = scmp.eq.s32.totalorder %s85, 0
    %s88 = sadd.s32 %s87, 1
    %s89 = scalar_select %p86, %s87, %s88
    %p92 = pneg %p86
    %p93 = scmp.eq.s32.totalorder %s9, 1
    %p94 = por %p92, %p93
    %p95 = scmp.ne.s32.totalorder %s87, %s90
    %p96 = scmp.eq.s32.totalorder %s9, 0
    %p97 = por %p95, %p96
    %p98 = scmp.ne.s32.totalorder %s87, %s90
    %p99 = scmp.eq.s32.totalorder %s14, 1
    %p100 = por %p98, %p99
    %p101 = scmp.ne.s32.totalorder %s90, %s91
    %p102 = scmp.eq.s32.totalorder %s14, 0
    %p103 = por %p101, %p102
    %p104 = scmp.ne.s32.totalorder %s90, %s91
    %p105 = scmp.eq.s32.totalorder %s15, 1
    %p106 = por %p104, %p105
    %p108 = scmp.ne.s32.totalorder %s91, %s107
    %p109 = scmp.eq.s32.totalorder %s15, 0
    %p110 = por %p108, %p109
    %p111 = scmp.le.s32.totalorder 1, %s9
    %p112 = scmp.lt.s32.totalorder %s9, 3
    %p113 = pnand %p111, %p112
    %p114 = pneg %p113
    // Predicated region
    $region9: #{downsample_block.3} parent=5 // pred_check
      _
    $region10: #{downsample_block.3} parent=5 // pred_check_branch
      %116 = sbr.rel (%p113) target = $region12
    $region11: #{downsample_block.3} parent=5 // pred_region
      %s117 = ssub.s32 %s9, 1
      // Predicated region
      $region13: #{downsample_block.3} parent=11 // pred_check
        %p118 = pneg %p56
      $region14: #{downsample_block.3} parent=11 // pred_check_branch
        %120 = sbr.rel (%p118) target = $region16
      $region15: #{downsample_block.3} parent=11 // pred_region
        _
      $region16: #{downsample_block.3} parent=11 // pred_fallthru
        _
      // Predicated region
      $region17: #{downsample_block.3} parent=11 // pred_check
        %p121 = pneg %p77
      $region18: #{downsample_block.3} parent=11 // pred_check_branch
        %123 = sbr.rel (%p121) target = $region20
      $region19: #{downsample_block.3} parent=11 // pred_region
        _
      $region20: #{downsample_block.3} parent=11 // pred_fallthru
        _
    $region12: #{downsample_block.3} parent=5 // pred_fallthru
      _
    %p124 = scmp.lt.s32.totalorder %s9, 2
    // Predicated region
    $region21: #{downsample_block.3} parent=5 // pred_check
      %p125 = pneg %p124
    $region22: #{downsample_block.3} parent=5 // pred_check_branch
      %127 = sbr.rel (%p125) target = $region24
    $region23: #{downsample_block.3} parent=5 // pred_region
      // Predicated region
      $region25: #{downsample_block.3} parent=23 // pred_check
        %p128 = pneg %p29
      $region26: #{downsample_block.3} parent=23 // pred_check_branch
        %130 = sbr.rel (%p128) target = $region28
      $region27: #{downsample_block.3} parent=23 // pred_region
        %s131 = smul.u32 8, %s9
        %p132 = scmp.lt.s32.totalorder %s131, 15
        %s133 = scalar_select %p132, %s131, 15
        %s134 = smul.addr %s133, 4
        %s135 = scalar_lea.vmem %s0, %s134
        %s136 = smul.u32 8, %s9
      $region28: #{downsample_block.3} parent=23 // pred_fallthru
        _
    $region24: #{downsample_block.3} parent=5 // pred_fallthru
      _
    %p137 = scmp.le.s32.totalorder 1, %s9
    %p138 = scmp.lt.s32.totalorder %s9, 3
    %p139 = pnand %p137, %p138
    %p140 = pneg %p139
    // Predicated region
    $region29: #{downsample_block.3} parent=5 // pred_check
      _
    $region30: #{downsample_block.3} parent=5 // pred_check_branch
      %142 = sbr.rel (%p139) target = $region32
    $region31: #{downsample_block.3} parent=5 // pred_region
      %s143 = ssub.s32 %s9, 1
      %s144 = smul.u32 8, %s14
      %p145 = scmp.lt.s32.totalorder %s144, 15
      %s146 = scalar_select %p145, %s144, 15
      %s147 = smul.addr %s146, 4
      %s148 = scalar_lea.vmem %s0, %s147
      %p149 = pneg %p35
      %p150 = pneg %p32
      %p151 = pneg %p56
      %p152 = pneg %p53
      %p153 = pneg %p77
      %p154 = pneg %p74
      %p155 = pneg %p103
      %p156 = pneg %p100
      %s157 = smul.u32 8, %s14
      %p158 = scmp.lt.s32.totalorder %s157, 15
      %s159 = scalar_select %p158, %s157, 15
      %s160 = smul.addr %s159, 8
      %s161 = scalar_lea.vmem %s3, %s160
      %s162 = smul.u32 8, %s14
      %p163 = scmp.lt.s32.totalorder %s162, 15
      %s164 = scalar_select %p163, %s162, 15
      %s165 = smul.addr %s164, 4
      %s166 = scalar_lea.vmem %s0, %s165
      %s167 = smul.u32 8, %s14
      %s168 = smul.u32 8, %s14
      %p169 = scmp.lt.s32.totalorder %s168, 15
      %s170 = scalar_select %p169, %s168, 15
      %s171 = smul.addr %s170, 8
      %s172 = scalar_lea.vmem %s3, %s171
      %s173 = smul.u32 8, %s14
      %v174 = vld [vmem:[%s166] sm:$0xf]
      %v175 = vld [vmem:[%s166 + $0x4] sm:$0xf]
      %v176 = vld [vmem:[%s166 + $0x8] sm:$0xf]
      %v177 = vld [vmem:[%s166 + $0xc] sm:$0xf]
      %v178 = vld [vmem:[%s166 + $0x10] sm:$0xf]
      %v179 = vld [vmem:[%s166 + $0x14] sm:$0xf]
      %v180 = vld [vmem:[%s166 + $0x18] sm:$0xf]
      %v181 = vld [vmem:[%s166 + $0x1c] sm:$0xf]
      %v182 = vunpack.c.l.bf16 %v174
      %v183 = vunpack.c.l.bf16 %v175
      %v184 = vunpack.c.l.bf16 %v176
      %v185 = vunpack.c.l.bf16 %v177
      %v186 = vunpack.c.l.bf16 %v178
      %v187 = vunpack.c.l.bf16 %v179
      %v188 = vunpack.c.l.bf16 %v180
      %v189 = vunpack.c.l.bf16 %v181
      %v190 = vld [vmem:[%s1] sm:$0x1]
      %v192 = vlaneseq
      %v193 = vshrl.u32 %v192, 7
      %v194 = vsub.s32 0, %v193
      %v195 = vrot.slane %v190, %v194
      %v197 = vmul.f32 %v182, %v195
      %v198 = vmul.f32 %v183, %v195
      %v199 = vmul.f32 %v184, %v195
      %v200 = vmul.f32 %v185, %v195
      %v201 = vmul.f32 %v186, %v195
      %v202 = vmul.f32 %v187, %v195
      %v203 = vmul.f32 %v188, %v195
      %v204 = vmul.f32 %v189, %v195
      %v205 = vld [vmem:[%s2] sm:$0x1]
      %v207 = vlaneseq
      %v208 = vshrl.u32 %v207, 7
      %v209 = vsub.s32 0, %v208
      %v210 = vrot.slane %v205, %v209
      %v212 = vadd.f32 %v197, %v210
      %v213 = vadd.f32 %v198, %v210
      %v214 = vadd.f32 %v199, %v210
      %v215 = vadd.f32 %v200, %v210
      %v216 = vadd.f32 %v201, %v210
      %v217 = vadd.f32 %v202, %v210
      %v218 = vadd.f32 %v203, %v210
      %v219 = vadd.f32 %v204, %v210
      %vm220 = vcmp.ge.f32.partialorder %v212, 0.0
      %vm221 = vcmp.ge.f32.partialorder %v213, 0.0
      %vm222 = vcmp.ge.f32.partialorder %v214, 0.0
      %vm223 = vcmp.ge.f32.partialorder %v215, 0.0
      %vm224 = vcmp.ge.f32.partialorder %v216, 0.0
      %vm225 = vcmp.ge.f32.partialorder %v217, 0.0
      %vm226 = vcmp.ge.f32.partialorder %v218, 0.0
      %vm227 = vcmp.ge.f32.partialorder %v219, 0.0
      %v228 = vmul.f32 %v212, 0.2
      %v229 = vmul.f32 %v213, 0.2
      %v230 = vmul.f32 %v214, 0.2
      %v231 = vmul.f32 %v215, 0.2
      %v232 = vmul.f32 %v216, 0.2
      %v233 = vmul.f32 %v217, 0.2
      %v234 = vmul.f32 %v218, 0.2
      %v235 = vmul.f32 %v219, 0.2
      %v236 = vsel %vm220, %v212, %v228
      %v237 = vsel %vm221, %v213, %v229
      %v238 = vsel %vm222, %v214, %v230
      %v239 = vsel %vm223, %v215, %v231
      %v240 = vsel %vm224, %v216, %v232
      %v241 = vsel %vm225, %v217, %v233
      %v242 = vsel %vm226, %v218, %v234
      %v243 = vsel %vm227, %v219, %v235
      %244 = vst [vmem:[%s172] sm:$0xff] %v236
      %245 = vst [vmem:[%s172 + $0x8] sm:$0xff] %v237
      %246 = vst [vmem:[%s172 + $0x10] sm:$0xff] %v238
      %247 = vst [vmem:[%s172 + $0x18] sm:$0xff] %v239
      %248 = vst [vmem:[%s172 + $0x20] sm:$0xff] %v240
      %249 = vst [vmem:[%s172 + $0x28] sm:$0xff] %v241
      %250 = vst [vmem:[%s172 + $0x30] sm:$0xff] %v242
      %251 = vst [vmem:[%s172 + $0x38] sm:$0xff] %v243
      %s252 = smul.u32 8, %s14
      %p253 = scmp.lt.s32.totalorder %s252, 15
      %s254 = scalar_select %p253, %s252, 15
      %s255 = smul.addr %s254, 8
      %s256 = scalar_lea.vmem %s3, %s255
      // Predicated region
      $region33: #{downsample_block.3} parent=31 // pred_check
        %p257 = pneg %p100
      $region34: #{downsample_block.3} parent=31 // pred_check_branch
        %259 = sbr.rel (%p257) target = $region36
      $region35: #{downsample_block.3} parent=31 // pred_region
        %s260 = smul.u32 8, %s14
      $region36: #{downsample_block.3} parent=31 // pred_fallthru
        _
    $region32: #{downsample_block.3} parent=5 // pred_fallthru
      _
    %p261 = scmp.le.s32.totalorder 2, %s9
    // Predicated region
    $region37: #{downsample_block.3} parent=5 // pred_check
      %p262 = pneg %p261
    $region38: #{downsample_block.3} parent=5 // pred_check_branch
      %264 = sbr.rel (%p262) target = $region40
    $region39: #{downsample_block.3} parent=5 // pred_region
      %s265 = ssub.s32 %s9, 2
      // Predicated region
      $region41: #{downsample_block.3} parent=39 // pred_check
        %p266 = pneg %p106
      $region42: #{downsample_block.3} parent=39 // pred_check_branch
        %268 = sbr.rel (%p266) target = $region44
      $region43: #{downsample_block.3} parent=39 // pred_region
        %s269 = smul.u32 8, %s15
        %p270 = scmp.lt.s32.totalorder %s269, 15
        %s271 = scalar_select %p270, %s269, 15
        %s272 = smul.addr %s271, 8
        %s273 = scalar_lea.vmem %s3, %s272
      $region44: #{downsample_block.3} parent=39 // pred_fallthru
        _
    $region40: #{downsample_block.3} parent=5 // pred_fallthru
      _
  $region6: #{downsample_block.3} parent=0 // loop_footer
    %s13 = sadd.s32 1, %s9
  $region7: #{downsample_block.3} parent=0 // loop_footer_branch
    %8 = sbr.rel target = $region3
  $region8: #{downsample_block.3} parent=0 // loop_exit
    _

// kernel: downsample_block.2
$region0: #{downsample_block.2}
  #allocation0 [shape = 'u32[]', space=smem, size = 0x4, offset = 0x4, fixed_abs, tag = 'smem constant byte address 0x4 - core index']
  #allocation1 [shape = 'u32[144,128]{1,0:T(1,128)}', space=vmem, size = 0x12000, scoped, tag = 'internal scratch']
  #allocation2 [shape = 'f32[64,128]{1,0:T(8,128)}', space=vmem, size = 0x8000, scoped, tag = 'scratch operand']
  %s0 = inlined_call_operand.vmem [shape: bf16[8,16,9,8], index: 0, kind: input, shape index: {}]
  %s1 = inlined_call_operand.vmem [shape: bf16[8,2,8,128], index: 1, kind: input, shape index: {}]
  %s2 = inlined_call_operand.vmem [shape: bf16[128,128], index: 2, kind: output, shape index: {0}]
  %s3 = inlined_call_operand.vmem [shape: f32[2,2,128], index: 3, kind: output, shape index: {1}]
  %4 = xla_tuple %s2, %s3
  %s5 = sld [smem:[#allocation0]]
  $region57: #{downsample_block.2} parent=0
    _
  %s7 = ssub.s32 1, %s5
  %s8 = scalar_select 0, %s7, %s5
  loop: start=0, step=1, limit=18
  $region2: #{downsample_block.2} parent=0 // loop_pre_header
    _
  $region3: #{downsample_block.2} parent=0 // loop_header
    %s10 = sphi 0, %s14
    %p11 = scmp.ge.s32.totalorder %s10, 18
    %s17 = sphi 0, %s29
    %s18 = sphi 0, %s25
    %s19 = sphi 0, %s17
    %s20 = sphi 0, %s18
    %s21 = sphi 0, %s19
    %s22 = sphi 0, %s20
    %s34 = sphi 0, %s36
    %s37 = sphi 0, %s34
    %s38 = sphi 0, %s37
    %s54 = sphi 0, %s38
    %s60 = sphi 0, %s62
    %s63 = sphi 0, %s60
    %s64 = sphi 0, %s63
    %s80 = sphi 0, %s64
    %s86 = sphi 0, %s88
    %s89 = sphi 0, %s86
    %s90 = sphi 0, %s89
    %s106 = sphi 0, %s90
    %s112 = sphi 0, %s114
    %s115 = sphi 0, %s112
    %s116 = sphi 0, %s115
    %s132 = sphi 0, %s116
  $region4: #{downsample_block.2} parent=0 // loop_header_branch
    %13 = sbr.rel (%p11) target = $region8
  $region5: #{downsample_block.2} parent=0 // loop_body
    %s15 = ssub.s32 %s10, 1
    %s16 = ssub.s32 %s10, 2
    %s23 = sadd.s32 1, %s18
    %p24 = scmp.ge.s32.totalorder %s23, 8
    %s25 = scalar_select %p24, 0, %s23
    %s26 = sadd.s32 1, %s17
    %s27 = scalar_select %p24, %s26, %s17
    %p28 = scmp.ge.s32.totalorder %s27, 2
    %s29 = scalar_select %p28, 0, %s27
    %s30 = ssub.s32 %s18, %s25
    %s31 = ssub.s32 %s17, %s29
    %s32 = sor.u32 %s30, %s31
    %p33 = scmp.eq.s32.totalorder %s32, 0
    %s35 = sadd.s32 %s34, 1
    %s36 = scalar_select %p33, %s34, %s35
    %p39 = pneg %p33
    %p40 = scmp.eq.s32.totalorder %s10, 15
    %p41 = por %p39, %p40
    %p42 = scmp.ne.s32.totalorder %s34, %s37
    %p43 = scmp.eq.s32.totalorder %s10, 0
    %p44 = por %p42, %p43
    %p45 = scmp.ne.s32.totalorder %s34, %s37
    %p46 = scmp.eq.s32.totalorder %s15, 15
    %p47 = por %p45, %p46
    %p48 = scmp.ne.s32.totalorder %s37, %s38
    %p49 = scmp.eq.s32.totalorder %s15, 0
    %p50 = por %p48, %p49
    %p51 = scmp.ne.s32.totalorder %s37, %s38
    %p52 = scmp.eq.s32.totalorder %s16, 15
    %p53 = por %p51, %p52
    %p55 = scmp.ne.s32.totalorder %s38, %s54
    %p56 = scmp.eq.s32.totalorder %s16, 0
    %p57 = por %p55, %p56
    %s58 = ssub.s32 %s18, %s25
    %p59 = scmp.eq.s32.totalorder %s58, 0
    %s61 = sadd.s32 %s60, 1
    %s62 = scalar_select %p59, %s60, %s61
    %p65 = pneg %p59
    %p66 = scmp.eq.s32.totalorder %s10, 15
    %p67 = por %p65, %p66
    %p68 = scmp.ne.s32.totalorder %s60, %s63
    %p69 = scmp.eq.s32.totalorder %s10, 0
    %p70 = por %p68, %p69
    %p71 = scmp.ne.s32.totalorder %s60, %s63
    %p72 = scmp.eq.s32.totalorder %s15, 15
    %p73 = por %p71, %p72
    %p74 = scmp.ne.s32.totalorder %s63, %s64
    %p75 = scmp.eq.s32.totalorder %s15, 0
    %p76 = por %p74, %p75
    %p77 = scmp.ne.s32.totalorder %s63, %s64
    %p78 = scmp.eq.s32.totalorder %s16, 15
    %p79 = por %p77, %p78
    %p81 = scmp.ne.s32.totalorder %s64, %s80
    %p82 = scmp.eq.s32.totalorder %s16, 0
    %p83 = por %p81, %p82
    %s84 = ssub.s32 %s17, %s29
    %p85 = scmp.eq.s32.totalorder %s84, 0
    %s87 = sadd.s32 %s86, 1
    %s88 = scalar_select %p85, %s86, %s87
    %p91 = pneg %p85
    %p92 = scmp.eq.s32.totalorder %s10, 15
    %p93 = por %p91, %p92
    %p94 = scmp.ne.s32.totalorder %s86, %s89
    %p95 = scmp.eq.s32.totalorder %s10, 0
    %p96 = por %p94, %p95
    %p97 = scmp.ne.s32.totalorder %s86, %s89
    %p98 = scmp.eq.s32.totalorder %s15, 15
    %p99 = por %p97, %p98
    %p100 = scmp.ne.s32.totalorder %s89, %s90
    %p101 = scmp.eq.s32.totalorder %s15, 0
    %p102 = por %p100, %p101
    %p103 = scmp.ne.s32.totalorder %s89, %s90
    %p104 = scmp.eq.s32.totalorder %s16, 15
    %p105 = por %p103, %p104
    %p107 = scmp.ne.s32.totalorder %s90, %s106
    %p108 = scmp.eq.s32.totalorder %s16, 0
    %p109 = por %p107, %p108
    %s110 = ssub.s32 %s17, %s29
    %p111 = scmp.eq.s32.totalorder %s110, 0
    %s113 = sadd.s32 %s112, 1
    %s114 = scalar_select %p111, %s112, %s113
    %p117 = pneg %p111
    %p118 = scmp.eq.s32.totalorder %s10, 15
    %p119 = por %p117, %p118
    %p120 = scmp.ne.s32.totalorder %s112, %s115
    %p121 = scmp.eq.s32.totalorder %s10, 0
    %p122 = por %p120, %p121
    %p123 = scmp.ne.s32.totalorder %s112, %s115
    %p124 = scmp.eq.s32.totalorder %s15, 15
    %p125 = por %p123, %p124
    %p126 = scmp.ne.s32.totalorder %s115, %s116
    %p127 = scmp.eq.s32.totalorder %s15, 0
    %p128 = por %p126, %p127
    %p129 = scmp.ne.s32.totalorder %s115, %s116
    %p130 = scmp.eq.s32.totalorder %s16, 15
    %p131 = por %p129, %p130
    %p133 = scmp.ne.s32.totalorder %s116, %s132
    %p134 = scmp.eq.s32.totalorder %s16, 0
    %p135 = por %p133, %p134
    %p136 = scmp.le.s32.totalorder 1, %s10
    %p137 = scmp.lt.s32.totalorder %s10, 17
    %p138 = pnand %p136, %p137
    %p139 = pneg %p138
    // Predicated region
    $region9: #{downsample_block.2} parent=5 // pred_check
      _
    $region10: #{downsample_block.2} parent=5 // pred_check_branch
      %141 = sbr.rel (%p138) target = $region12
    $region11: #{downsample_block.2} parent=5 // pred_region
      %s142 = ssub.s32 %s10, 1
    $region12: #{downsample_block.2} parent=5 // pred_fallthru
      _
    %p143 = scmp.lt.s32.totalorder %s10, 16
    // Predicated region
    $region13: #{downsample_block.2} parent=5 // pred_check
      %p144 = pneg %p143
    $region14: #{downsample_block.2} parent=5 // pred_check_branch
      %146 = sbr.rel (%p144) target = $region16
    $region15: #{downsample_block.2} parent=5 // pred_region
      // Predicated region
      $region17: #{downsample_block.2} parent=15 // pred_check
        %p147 = pneg %p44
      $region18: #{downsample_block.2} parent=15 // pred_check_branch
        %149 = sbr.rel (%p147) target = $region20
      $region19: #{downsample_block.2} parent=15 // pred_region
        %s150 = smul.u32 8, %s17
        %p151 = scmp.lt.s32.totalorder %s18, 7
        %s152 = scalar_select %p151, %s18, 7
        %p153 = scmp.lt.s32.totalorder %s150, 15
        %s154 = scalar_select %p153, %s150, 15
        %s155 = smul.addr %s154, 2
        %s156 = smul.addr %s152, 32
        %s157 = sadd.s32 %s155, %s156
        %s158 = smul.addr %s157, 4
        %s159 = scalar_lea.vmem %s0, %s158
        %s160 = smul.u32 8, %s17
      $region20: #{downsample_block.2} parent=15 // pred_fallthru
        _
      // Predicated region
      $region21: #{downsample_block.2} parent=15 // pred_check
        %p161 = pneg %p70
      $region22: #{downsample_block.2} parent=15 // pred_check_branch
        %163 = sbr.rel (%p161) target = $region24
      $region23: #{downsample_block.2} parent=15 // pred_region
        %p164 = scmp.lt.s32.totalorder %s18, 7
        %s165 = scalar_select %p164, %s18, 7
        %s166 = smul.addr %s165, 2
        %s167 = smul.addr %s166, 4
        %s168 = scalar_lea.vmem %s1, %s167
      $region24: #{downsample_block.2} parent=15 // pred_fallthru
        _
    $region16: #{downsample_block.2} parent=5 // pred_fallthru
      _
    %p169 = scmp.le.s32.totalorder 1, %s10
    %p170 = scmp.lt.s32.totalorder %s10, 17
    %p171 = pnand %p169, %p170
    %p172 = pneg %p171
    // Predicated region
    $region25: #{downsample_block.2} parent=5 // pred_check
      _
    $region26: #{downsample_block.2} parent=5 // pred_check_branch
      %174 = sbr.rel (%p171) target = $region28
    $region27: #{downsample_block.2} parent=5 // pred_region
      %s175 = ssub.s32 %s10, 1
      %s176 = smul.u32 8, %s19
      %p177 = scmp.lt.s32.totalorder %s20, 7
      %s178 = scalar_select %p177, %s20, 7
      %p179 = scmp.lt.s32.totalorder %s176, 15
      %s180 = scalar_select %p179, %s176, 15
      %s181 = smul.addr %s180, 2
      %s182 = smul.addr %s178, 32
      %s183 = sadd.s32 %s181, %s182
      %s184 = smul.addr %s183, 4
      %s185 = scalar_lea.vmem %s0, %s184
      %p186 = pneg %p50
      %p187 = pneg %p47
      %p188 = scmp.lt.s32.totalorder %s20, 7
      %s189 = scalar_select %p188, %s20, 7
      %s190 = smul.addr %s189, 2
      %s191 = smul.addr %s190, 4
      %s192 = scalar_lea.vmem %s1, %s191
      %p193 = pneg %p76
      %p194 = pneg %p73
      %p195 = pneg %p102
      %p196 = pneg %p99
      %s197 = smul.u32 8, %s19
      %p198 = scmp.lt.s32.totalorder %s197, 15
      %s199 = scalar_select %p198, %s197, 15
      %s200 = smul.addr %s199, 4
      %s201 = scalar_lea.vmem %s2, %s200
      %p202 = pneg %p128
      %p203 = pneg %p125
      %p204 = scmp.lt.s32.totalorder %s19, 1
      %s205 = scalar_select %p204, %s19, 1
      %s206 = smul.addr %s205, 2
      %s207 = scalar_lea.vmem %s3, %s206
      %s208 = smul.u32 8, %s19
      %p209 = scmp.lt.s32.totalorder %s20, 7
      %s210 = scalar_select %p209, %s20, 7
      %p211 = scmp.lt.s32.totalorder %s208, 15
      %s212 = scalar_select %p211, %s208, 15
      %s213 = smul.addr %s212, 2
      %s214 = smul.addr %s210, 32
      %s215 = sadd.s32 %s213, %s214
      %s216 = smul.addr %s215, 4
      %s217 = scalar_lea.vmem %s0, %s216
      %s218 = smul.u32 8, %s19
      %p219 = scmp.lt.s32.totalorder %s20, 7
      %s220 = scalar_select %p219, %s20, 7
      %s221 = smul.addr %s220, 2
      %s222 = smul.addr %s221, 4
      %s223 = scalar_lea.vmem %s1, %s222
      %s224 = smul.u32 8, %s19
      %p225 = scmp.lt.s32.totalorder %s224, 15
      %s226 = scalar_select %p225, %s224, 15
      %s227 = smul.addr %s226, 4
      %s228 = scalar_lea.vmem %s2, %s227
      %s229 = smul.u32 8, %s19
      %p230 = scmp.lt.s32.totalorder %s19, 1
      %s231 = scalar_select %p230, %s19, 1
      %s232 = smul.addr %s231, 2
      %s233 = scalar_lea.vmem %s3, %s232
      %p235 = scmp.eq.s32.totalorder %s20, 0
      // Predicated region
      $region29: #{downsample_block.2} parent=27 // pred_check
        %p236 = pneg %p235
      $region30: #{downsample_block.2} parent=27 // pred_check_branch
        %238 = sbr.rel (%p236) target = $region32
      $region31: #{downsample_block.2} parent=27 // pred_region
        %239 = vst [vmem:[#allocation2] sm:$0xff] 0.0
        %240 = vst [vmem:[#allocation2 + $0x8] sm:$0xff] 0.0
        %241 = vst [vmem:[#allocation2 + $0x10] sm:$0xff] 0.0
        %242 = vst [vmem:[#allocation2 + $0x18] sm:$0xff] 0.0
        %243 = vst [vmem:[#allocation2 + $0x20] sm:$0xff] 0.0
        %244 = vst [vmem:[#allocation2 + $0x28] sm:$0xff] 0.0
        %245 = vst [vmem:[#allocation2 + $0x30] sm:$0xff] 0.0
        %246 = vst [vmem:[#allocation2 + $0x38] sm:$0xff] 0.0
      $region32: #{downsample_block.2} parent=27 // pred_fallthru
        _
      %v247 = vld [vmem:[%s217] sm:$0xf]
      %v248 = vld [vmem:[%s217 + $0x8] sm:$0xf]
      %v249 = vld [vmem:[%s217 + $0x10] sm:$0xf]
      %v250 = vld [vmem:[%s217 + $0x18] sm:$0xf]
      %v251 = vld [vmem:[%s217 + $0x20] sm:$0xf]
      %v252 = vld [vmem:[%s217 + $0x28] sm:$0xf]
      %v253 = vld [vmem:[%s217 + $0x30] sm:$0xf]
      %v254 = vld [vmem:[%s217 + $0x38] sm:$0xf]
      %v255 = vld [vmem:[#allocation2] sm:$0xff]
      %v256 = vld [vmem:[#allocation2 + $0x8] sm:$0xff]
      %v257 = vld [vmem:[#allocation2 + $0x10] sm:$0xff]
      %v258 = vld [vmem:[#allocation2 + $0x18] sm:$0xff]
      %v259 = vld [vmem:[#allocation2 + $0x20] sm:$0xff]
      %v260 = vld [vmem:[#allocation2 + $0x28] sm:$0xff]
      %v261 = vld [vmem:[#allocation2 + $0x30] sm:$0xff]
      %v262 = vld [vmem:[#allocation2 + $0x38] sm:$0xff]
      %v263 = vld [vmem:[%s223] sm:$0xf]
      %v272 = vunpack.c.l.b16 %v247
      %v273 = vunpack.c.l.b16 %v248
      %v274 = vunpack.c.l.b16 %v249
      %v275 = vunpack.c.l.b16 %v250
      %v276 = vunpack.c.l.b16 %v251
      %v277 = vunpack.c.l.b16 %v252
      %v278 = vunpack.c.l.b16 %v253
      %v279 = vunpack.c.l.b16 %v254
      %v280 = vpack.c.b16 %v273, %v272
      %v281 = vpack.c.b16 %v275, %v274
      %v282 = vpack.c.b16 %v277, %v276
      %v283 = vpack.c.b16 %v279, %v278
      %vm284 = vcmask 64512
      %v286 = vsel %vm284, %v280, 0
      %v289 = vsel %vm284, %v281, 0
      %v292 = vsel %vm284, %v282, 0
      %v295 = vsel %vm284, %v283, 0
      %vm297 = vcmask 1043456
      %v299 = vsel %vm297, %v263, 0
      %301 = vmatprep.subr.bf16.mxu0 0
      %302 = vmatpush1.bf16.msra.mxu0 %v299
      %303 = vmatprep.subr.bf16.mxu0 0
      %304 = vmatpush1.bf16.msra.mxu0 0
      %305 = vmatprep.subr.bf16.mxu0 0
      %306 = vmatpush1.bf16.msra.mxu0 0
      %307 = vmatprep.subr.bf16.mxu0 0
      %308 = vmatpush1.bf16.msra.mxu0 0
      %309 = vmatprep.subr.bf16.mxu0 0
      %310 = vmatpush1.bf16.msra.mxu0 0
      %311 = vmatprep.subr.bf16.mxu0 0
      %312 = vmatpush1.bf16.msra.mxu0 0
      %313 = vmatprep.subr.bf16.mxu0 0
      %314 = vmatpush1.bf16.msra.mxu0 0
      %315 = vmatprep.subr.bf16.mxu0 0
      %316 = vmatpush1.bf16.msra.mxu0 0
      %317 = vmatprep.subr.bf16.mxu0 0
      %318 = vmatpush1.bf16.msra.mxu0 0
      %319 = vmatprep.subr.bf16.mxu0 0
      %320 = vmatpush1.bf16.msra.mxu0 0
      %321 = vmatprep.subr.bf16.mxu0 0
      %322 = vmatpush1.bf16.msra.mxu0 0
      %323 = vmatprep.subr.bf16.mxu0 0
      %324 = vmatpush1.bf16.msra.mxu0 0
      %325 = vmatprep.subr.bf16.mxu0 0
      %326 = vmatpush1.bf16.msra.mxu0 0
      %327 = vmatprep.subr.bf16.mxu0 0
      %328 = vmatpush1.bf16.msra.mxu0 0
      %329 = vmatprep.subr.bf16.mxu0 0
      %330 = vmatpush1.bf16.msra.mxu0 0
      %331 = vmatprep.subr.bf16.mxu0 0
      %332 = vmatpush1.bf16.msra.mxu0 0
      %333 = vmatprep.mubr.bf16.mxu0 0
      %334 = vmatmul.mubr.bf16.gmra.mrb[0].mxu0 %v286
      %v335 = vpop.f32.mrb[0].mxu0
      %v336 = vadd.f32 0.0, %v335
      %v337 = vpop.f32.mrb[0].mxu0
      %v338 = vpop.f32.mrb[0].mxu0
      %v339 = vadd.f32 0.0, %v338
      %v340 = vpop.f32.mrb[0].mxu0
      %341 = vmatprep.mubr.bf16.mxu0 0
      %342 = vmatmul.mubr.bf16.gmra.mrb[0].mxu0 %v289
      %v343 = vpop.f32.mrb[0].mxu0
      %v344 = vadd.f32 0.0, %v343
      %v345 = vpop.f32.mrb[0].mxu0
      %v346 = vpop.f32.mrb[0].mxu0
      %v347 = vadd.f32 0.0, %v346
      %v348 = vpop.f32.mrb[0].mxu0
      %349 = vmatprep.mubr.bf16.mxu0 0
      %350 = vmatmul.mubr.bf16.gmra.mrb[0].mxu0 %v292
      %v351 = vpop.f32.mrb[0].mxu0
      %v352 = vadd.f32 0.0, %v351
      %v353 = vpop.f32.mrb[0].mxu0
      %v354 = vpop.f32.mrb[0].mxu0
      %v355 = vadd.f32 0.0, %v354
      %v356 = vpop.f32.mrb[0].mxu0
      %357 = vmatprep.mubr.bf16.mxu0 0
      %358 = vmatmul.mubr.bf16.gmra.mrb[0].mxu0 %v295
      %v359 = vpop.f32.mrb[0].mxu0
      %v360 = vadd.f32 0.0, %v359
      %v361 = vpop.f32.mrb[0].mxu0
      %v362 = vpop.f32.mrb[0].mxu0
      %v363 = vadd.f32 0.0, %v362
      %v364 = vpop.f32.mrb[0].mxu0
      %365 = vdwg.mxu0
      %v366 = vadd.f32 %v255, %v336
      %v367 = vadd.f32 %v256, %v339
      %v368 = vadd.f32 %v257, %v344
      %v369 = vadd.f32 %v258, %v347
      %v370 = vadd.f32 %v259, %v352
      %v371 = vadd.f32 %v260, %v355
      %v372 = vadd.f32 %v261, %v360
      %v373 = vadd.f32 %v262, %v363
      %374 = vst [vmem:[#allocation2] sm:$0xff] %v366
      %375 = vst [vmem:[#allocation2 + $0x8] sm:$0xff] %v367
      %376 = vst [vmem:[#allocation2 + $0x10] sm:$0xff] %v368
      %377 = vst [vmem:[#allocation2 + $0x18] sm:$0xff] %v369
      %378 = vst [vmem:[#allocation2 + $0x20] sm:$0xff] %v370
      %379 = vst [vmem:[#allocation2 + $0x28] sm:$0xff] %v371
      %380 = vst [vmem:[#allocation2 + $0x30] sm:$0xff] %v372
      %381 = vst [vmem:[#allocation2 + $0x38] sm:$0xff] %v373
      %v382 = vld [vmem:[%s217] sm:$0xf]
      %v383 = vld [vmem:[%s217 + $0x4] sm:$0x1]
      %v384 = vld [vmem:[%s217 + $0x8] sm:$0xf]
      %v385 = vld [vmem:[%s217 + $0xc] sm:$0x1]
      %v386 = vld [vmem:[%s217 + $0x10] sm:$0xf]
      %v387 = vld [vmem:[%s217 + $0x14] sm:$0x1]
      %v388 = vld [vmem:[%s217 + $0x18] sm:$0xf]
      %v389 = vld [vmem:[%s217 + $0x1c] sm:$0x1]
      %v390 = vld [vmem:[%s217 + $0x20] sm:$0xf]
      %v391 = vld [vmem:[%s217 + $0x24] sm:$0x1]
      %v392 = vld [vmem:[%s217 + $0x28] sm:$0xf]
      %v393 = vld [vmem:[%s217 + $0x2c] sm:$0x1]
      %v394 = vld [vmem:[%s217 + $0x30] sm:$0xf]
      %v395 = vld [vmem:[%s217 + $0x34] sm:$0x1]
      %v396 = vld [vmem:[%s217 + $0x38] sm:$0xf]
      %v397 = vld [vmem:[%s217 + $0x3c] sm:$0x1]
      %vm398 = vsmask.f32 3328
      %vm399 = vsmask.f32 7440
      %vm400 = vmor %vm398, %vm399
      %v402 = vshrl.u32 %v382, 16
      %v404 = vrot.slane %v402, 4
      %v405 = vshll.u32 %v382, 16
      %v407 = vrot.slane %v405, 5
      %v408 = vor.u32 %v404, %v407
      %v409 = vrot.slane %v408, 4
      %v411 = vshll.u32 %v383, 16
      %v413 = vrot.slane %v411, 5
      %v414 = vsel %vm400, %v409, %v413
      %v416 = vshrl.u32 %v384, 16
      %v418 = vrot.slane %v416, 4
      %v419 = vshll.u32 %v384, 16
      %v421 = vrot.slane %v419, 5
      %v422 = vor.u32 %v418, %v421
      %v423 = vrot.slane %v422, 4
      %v425 = vshll.u32 %v385, 16
      %v427 = vrot.slane %v425, 5
      %v428 = vsel %vm400, %v423, %v427
      %v430 = vshrl.u32 %v386, 16
      %v432 = vrot.slane %v430, 4
      %v433 = vshll.u32 %v386, 16
      %v435 = vrot.slane %v433, 5
      %v436 = vor.u32 %v432, %v435
      %v437 = vrot.slane %v436, 4
      %v439 = vshll.u32 %v387, 16
      %v441 = vrot.slane %v439, 5
      %v442 = vsel %vm400, %v437, %v441
      %v444 = vshrl.u32 %v388, 16
      %v446 = vrot.slane %v444, 4
      %v447 = vshll.u32 %v388, 16
      %v449 = vrot.slane %v447, 5
      %v450 = vor.u32 %v446, %v449
      %v451 = vrot.slane %v450, 4
      %v453 = vshll.u32 %v389, 16
      %v455 = vrot.slane %v453, 5
      %v456 = vsel %vm400, %v451, %v455
      %v458 = vshrl.u32 %v390, 16
      %v460 = vrot.slane %v458, 4
      %v461 = vshll.u32 %v390, 16
      %v463 = vrot.slane %v461, 5
      %v464 = vor.u32 %v460, %v463
      %v465 = vrot.slane %v464, 4
      %v467 = vshll.u32 %v391, 16
      %v469 = vrot.slane %v467, 5
      %v470 = vsel %vm400, %v465, %v469
      %v472 = vshrl.u32 %v392, 16
      %v474 = vrot.slane %v472, 4
      %v475 = vshll.u32 %v392, 16
      %v477 = vrot.slane %v475, 5
      %v478 = vor.u32 %v474, %v477
      %v479 = vrot.slane %v478, 4
      %v481 = vshll.u32 %v393, 16
      %v483 = vrot.slane %v481, 5
      %v484 = vsel %vm400, %v479, %v483
      %v486 = vshrl.u32 %v394, 16
      %v488 = vrot.slane %v486, 4
      %v489 = vshll.u32 %v394, 16
      %v491 = vrot.slane %v489, 5
      %v492 = vor.u32 %v488, %v491
      %v493 = vrot.slane %v492, 4
      %v495 = vshll.u32 %v395, 16
      %v497 = vrot.slane %v495, 5
      %v498 = vsel %vm400, %v493, %v497
      %v500 = vshrl.u32 %v396, 16
      %v502 = vrot.slane %v500, 4
      %v503 = vshll.u32 %v396, 16
      %v505 = vrot.slane %v503, 5
      %v506 = vor.u32 %v502, %v505
      %v507 = vrot.slane %v506, 4
      %v509 = vshll.u32 %v397, 16
      %v511 = vrot.slane %v509, 5
      %v512 = vsel %vm400, %v507, %v511
      %v513 = vld [vmem:[#allocation2] sm:$0xff]
      %v514 = vld [vmem:[#allocation2 + $0x8] sm:$0xff]
      %v515 = vld [vmem:[#allocation2 + $0x10] sm:$0xff]
      %v516 = vld [vmem:[#allocation2 + $0x18] sm:$0xff]
      %v517 = vld [vmem:[#allocation2 + $0x20] sm:$0xff]
      %v518 = vld [vmem:[#allocation2 + $0x28] sm:$0xff]
      %v519 = vld [vmem:[#allocation2 + $0x30] sm:$0xff]
      %v520 = vld [vmem:[#allocation2 + $0x38] sm:$0xff]
      %s521 = scalar_lea.vmem %s223, 4
      %v522 = vld [vmem:[%s521] sm:$0xf]
      %v523 = vunpack.c.l.b16 %v414
      %v524 = vunpack.c.l.b16 %v428
      %v525 = vunpack.c.l.b16 %v442
      %v526 = vunpack.c.l.b16 %v456
      %v527 = vunpack.c.l.b16 %v470
      %v528 = vunpack.c.l.b16 %v484
      %v529 = vunpack.c.l.b16 %v498
      %v530 = vunpack.c.l.b16 %v512
      %v531 = vpack.c.b16 %v524, %v523
      %v532 = vpack.c.b16 %v526, %v525
      %v533 = vpack.c.b16 %v528, %v527
      %v534 = vpack.c.b16 %v530, %v529
      %v536 = vsel %vm284, %v531, 0
      %v539 = vsel %vm284, %v532, 0
      %v542 = vsel %vm284, %v533, 0
      %v545 = vsel %vm284, %v534, 0
      %v548 = vsel %vm297, %v522, 0
      %550 = vmatprep.subr.bf16.mxu0 0
      %551 = vmatpush1.bf16.msra.mxu0 %v548
      %552 = vmatprep.subr.bf16.mxu0 0
      %553 = vmatpush1.bf16.msra.mxu0 0
      %554 = vmatprep.subr.bf16.mxu0 0
      %555 = vmatpush1.bf16.msra.mxu0 0
      %556 = vmatprep.subr.bf16.mxu0 0
      %557 = vmatpush1.bf16.msra.mxu0 0
      %558 = vmatprep.subr.bf16.mxu0 0
      %559 = vmatpush1.bf16.msra.mxu0 0
      %560 = vmatprep.subr.bf16.mxu0 0
      %561 = vmatpush1.bf16.msra.mxu0 0
      %562 = vmatprep.subr.bf16.mxu0 0
      %563 = vmatpush1.bf16.msra.mxu0 0
      %564 = vmatprep.subr.bf16.mxu0 0
      %565 = vmatpush1.bf16.msra.mxu0 0
      %566 = vmatprep.subr.bf16.mxu0 0
      %567 = vmatpush1.bf16.msra.mxu0 0
      %568 = vmatprep.subr.bf16.mxu0 0
      %569 = vmatpush1.bf16.msra.mxu0 0
      %570 = vmatprep.subr.bf16.mxu0 0
      %571 = vmatpush1.bf16.msra.mxu0 0
      %572 = vmatprep.subr.bf16.mxu0 0
      %573 = vmatpush1.bf16.msra.mxu0 0
      %574 = vmatprep.subr.bf16.mxu0 0
      %575 = vmatpush1.bf16.msra.mxu0 0
      %576 = vmatprep.subr.bf16.mxu0 0
      %577 = vmatpush1.bf16.msra.mxu0 0
      %578 = vmatprep.subr.bf16.mxu0 0
      %579 = vmatpush1.bf16.msra.mxu0 0
      %580 = vmatprep.subr.bf16.mxu0 0
      %581 = vmatpush1.bf16.msra.mxu0 0
      %582 = vmatprep.mubr.bf16.mxu0 0
      %583 = vmatmul.mubr.bf16.gmra.mrb[0].mxu0 %v536
      %v584 = vpop.f32.mrb[0].mxu0
      %v585 = vadd.f32 0.0, %v584
      %v586 = vpop.f32.mrb[0].mxu0
      %v587 = vpop.f32.mrb[0].mxu0
      %v588 = vadd.f32 0.0, %v587
      %v589 = vpop.f32.mrb[0].mxu0
      %590 = vmatprep.mubr.bf16.mxu0 0
      %591 = vmatmul.mubr.bf16.gmra.mrb[0].mxu0 %v539
      %v592 = vpop.f32.mrb[0].mxu0
      %v593 = vadd.f32 0.0, %v592
      %v594 = vpop.f32.mrb[0].mxu0
      %v595 = vpop.f32.mrb[0].mxu0
      %v596 = vadd.f32 0.0, %v595
      %v597 = vpop.f32.mrb[0].mxu0
      %598 = vmatprep.mubr.bf16.mxu0 0
      %599 = vmatmul.mubr.bf16.gmra.mrb[0].mxu0 %v542
      %v600 = vpop.f32.mrb[0].mxu0
      %v601 = vadd.f32 0.0, %v600
      %v602 = vpop.f32.mrb[0].mxu0
      %v603 = vpop.f32.mrb[0].mxu0
      %v604 = vadd.f32 0.0, %v603
      %v605 = vpop.f32.mrb[0].mxu0
      %606 = vmatprep.mubr.bf16.mxu0 0
      %607 = vmatmul.mubr.bf16.gmra.mrb[0].mxu0 %v545
      %v608 = vpop.f32.mrb[0].mxu0
      %v609 = vadd.f32 0.0, %v608
      %v610 = vpop.f32.mrb[0].mxu0
      %v611 = vpop.f32.mrb[0].mxu0
      %v612 = vadd.f32 0.0, %v611
      %v613 = vpop.f32.mrb[0].mxu0
      %614 = vdwg.mxu0
      %v615 = vadd.f32 %v513, %v585
      %v616 = vadd.f32 %v514, %v588
      %v617 = vadd.f32 %v515, %v593
      %v618 = vadd.f32 %v516, %v596
      %v619 = vadd.f32 %v517, %v601
      %v620 = vadd.f32 %v518, %v604
      %v621 = vadd.f32 %v519, %v609
      %v622 = vadd.f32 %v520, %v612
      %623 = vst [vmem:[#allocation2] sm:$0xff] %v615
      %624 = vst [vmem:[#allocation2 + $0x8] sm:$0xff] %v616
      %625 = vst [vmem:[#allocation2 + $0x10] sm:$0xff] %v617
      %626 = vst [vmem:[#allocation2 + $0x18] sm:$0xff] %v618
      %627 = vst [vmem:[#allocation2 + $0x20] sm:$0xff] %v619
      %628 = vst [vmem:[#allocation2 + $0x28] sm:$0xff] %v620
      %629 = vst [vmem:[#allocation2 + $0x30] sm:$0xff] %v621
      %630 = vst [vmem:[#allocation2 + $0x38] sm:$0xff] %v622
      %p631 = scmp.eq.s32.totalorder %s20, 7
      // Predicated region
      $region33: #{downsample_block.2} parent=27 // pred_check
        %p632 = pneg %p631
      $region34: #{downsample_block.2} parent=27 // pred_check_branch
        %634 = sbr.rel (%p632) target = $region36
      $region35: #{downsample_block.2} parent=27 // pred_region
        %v635 = vld [vmem:[#allocation2] sm:$0xff]
        %v636 = vld [vmem:[#allocation2 + $0x8] sm:$0xff]
        %v637 = vld [vmem:[#allocation2 + $0x10] sm:$0xff]
        %v638 = vld [vmem:[#allocation2 + $0x18] sm:$0xff]
        %v639 = vld [vmem:[#allocation2 + $0x20] sm:$0xff]
        %v640 = vld [vmem:[#allocation2 + $0x28] sm:$0xff]
        %v641 = vld [vmem:[#allocation2 + $0x30] sm:$0xff]
        %v642 = vld [vmem:[#allocation2 + $0x38] sm:$0xff]
        %v643 = vpack.c.bf16 %v636, %v635
        %v644 = vpack.c.bf16 %v638, %v637
        %v645 = vpack.c.bf16 %v640, %v639
        %v646 = vpack.c.bf16 %v642, %v641
        %v651 = vunpack.c.l.b16 %v643
        %v652 = vunpack.c.h.b16 %v643
        %v653 = vunpack.c.l.b16 %v644
        %v654 = vunpack.c.h.b16 %v644
        %v655 = vunpack.c.l.b16 %v645
        %v656 = vunpack.c.h.b16 %v645
        %v657 = vunpack.c.l.b16 %v646
        %v658 = vunpack.c.h.b16 %v646
        %v659 = vpack.c.b16 %v651, %v651
        %v660 = vpack.c.b16 %v652, %v652
        %v661 = vpack.c.b16 %v653, %v653
        %v662 = vpack.c.b16 %v654, %v654
        %v663 = vpack.c.b16 %v655, %v655
        %v664 = vpack.c.b16 %v656, %v656
        %v665 = vpack.c.b16 %v657, %v657
        %v666 = vpack.c.b16 %v658, %v658
        %675 = vst [vmem:[%s228] sm:$0xf] %v659
        %676 = vst [vmem:[%s228 + $0x4] sm:$0xf] %v660
        %677 = vst [vmem:[%s228 + $0x8] sm:$0xf] %v661
        %678 = vst [vmem:[%s228 + $0xc] sm:$0xf] %v662
        %679 = vst [vmem:[%s228 + $0x10] sm:$0xf] %v663
        %680 = vst [vmem:[%s228 + $0x14] sm:$0xf] %v664
        %681 = vst [vmem:[%s228 + $0x18] sm:$0xf] %v665
        %682 = vst [vmem:[%s228 + $0x1c] sm:$0xf] %v666
        %v683 = vadd.f32 %v635, %v636
        %v684 = vadd.f32 %v683, %v637
        %v685 = vadd.f32 %v684, %v638
        %v686 = vadd.f32 %v685, %v639
        %v687 = vadd.f32 %v686, %v640
        %v688 = vadd.f32 %v687, %v641
        %v689 = vadd.f32 %v688, %v642
        %v690 = vrot.slane %v689, 4
        %v691 = vadd.f32 %v689, %v690
        %v692 = vrot.slane %v691, 2
        %v693 = vadd.f32 %v691, %v692
        %v694 = vrot.slane %v693, 1
        %v695 = vadd.f32 %v693, %v694
        %696 = vst [vmem:[%s233] sm:$0x1] %v695
        %v697 = vmul.f32 %v635, %v635
        %v698 = vmul.f32 %v636, %v636
        %v699 = vmul.f32 %v637, %v637
        %v700 = vmul.f32 %v638, %v638
        %v701 = vmul.f32 %v639, %v639
        %v702 = vmul.f32 %v640, %v640
        %v703 = vmul.f32 %v641, %v641
        %v704 = vmul.f32 %v642, %v642
        %v705 = vadd.f32 %v697, %v698
        %v706 = vadd.f32 %v705, %v699
        %v707 = vadd.f32 %v706, %v700
        %v708 = vadd.f32 %v707, %v701
        %v709 = vadd.f32 %v708, %v702
        %v710 = vadd.f32 %v709, %v703
        %v711 = vadd.f32 %v710, %v704
        %v712 = vrot.slane %v711, 4
        %v713 = vadd.f32 %v711, %v712
        %v714 = vrot.slane %v713, 2
        %v715 = vadd.f32 %v713, %v714
        %v716 = vrot.slane %v715, 1
        %v717 = vadd.f32 %v715, %v716
        %718 = vst [vmem:[%s233 + $0x1] sm:$0x1] %v717
      $region36: #{downsample_block.2} parent=27 // pred_fallthru
        _
      %s719 = smul.u32 8, %s19
      %p720 = scmp.lt.s32.totalorder %s719, 15
      %s721 = scalar_select %p720, %s719, 15
      %s722 = smul.addr %s721, 4
      %s723 = scalar_lea.vmem %s2, %s722
      %p724 = scmp.lt.s32.totalorder %s19, 1
      %s725 = scalar_select %p724, %s19, 1
      %s726 = smul.addr %s725, 2
      %s727 = scalar_lea.vmem %s3, %s726
      // Predicated region
      $region37: #{downsample_block.2} parent=27 // pred_check
        %p728 = pneg %p99
      $region38: #{downsample_block.2} parent=27 // pred_check_branch
        %730 = sbr.rel (%p728) target = $region40
      $region39: #{downsample_block.2} parent=27 // pred_region
        %s731 = smul.u32 8, %s19
      $region40: #{downsample_block.2} parent=27 // pred_fallthru
        _
      // Predicated region
      $region41: #{downsample_block.2} parent=27 // pred_check
        %p732 = pneg %p125
      $region42: #{downsample_block.2} parent=27 // pred_check_branch
        %734 = sbr.rel (%p732) target = $region44
      $region43: #{downsample_block.2} parent=27 // pred_region
        _
      $region44: #{downsample_block.2} parent=27 // pred_fallthru
        _
    $region28: #{downsample_block.2} parent=5 // pred_fallthru
      _
    %p735 = scmp.le.s32.totalorder 2, %s10
    // Predicated region
    $region45: #{downsample_block.2} parent=5 // pred_check
      %p736 = pneg %p735
    $region46: #{downsample_block.2} parent=5 // pred_check_branch
      %738 = sbr.rel (%p736) target = $region48
    $region47: #{downsample_block.2} parent=5 // pred_region
      %s739 = ssub.s32 %s10, 2
      // Predicated region
      $region49: #{downsample_block.2} parent=47 // pred_check
        %p740 = pneg %p105
      $region50: #{downsample_block.2} parent=47 // pred_check_branch
        %742 = sbr.rel (%p740) target = $region52
      $region51: #{downsample_block.2} parent=47 // pred_region
        %s743 = smul.u32 8, %s21
        %p744 = scmp.lt.s32.totalorder %s743, 15
        %s745 = scalar_select %p744, %s743, 15
        %s746 = smul.addr %s745, 4
        %s747 = scalar_lea.vmem %s2, %s746
      $region52: #{downsample_block.2} parent=47 // pred_fallthru
        _
      // Predicated region
      $region53: #{downsample_block.2} parent=47 // pred_check
        %p748 = pneg %p131
      $region54: #{downsample_block.2} parent=47 // pred_check_branch
        %750 = sbr.rel (%p748) target = $region56
      $region55: #{downsample_block.2} parent=47 // pred_region
        %p751 = scmp.lt.s32.totalorder %s21, 1
        %s752 = scalar_select %p751, %s21, 1
        %s753 = smul.addr %s752, 2
        %s754 = scalar_lea.vmem %s3, %s753
      $region56: #{downsample_block.2} parent=47 // pred_fallthru
        _
    $region48: #{downsample_block.2} parent=5 // pred_fallthru
      _
  $region6: #{downsample_block.2} parent=0 // loop_footer
    %s14 = sadd.s32 1, %s10
  $region7: #{downsample_block.2} parent=0 // loop_footer_branch
    %9 = sbr.rel target = $region3
  $region8: #{downsample_block.2} parent=0 // loop_exit
    _

</llo_original>
